<compile_context>
chip_gen: v5e
topology: v5e:2x2
jax: 0.10.0
libtpu: 0.0.40
codegen_flags: <defaults>
</compile_context>

<pallas_src>
import functools

import jax
import jax.numpy as jnp
from jax.experimental import pallas as pl
from jax.experimental.pallas import tpu as pltpu

_VMEM_LIMIT_BYTES = 48 * 1024 * 1024
_FUSED_X_BYTES_MAX = 2 * 1024 * 1024  # single-kernel fast path threshold


def _grn_fused_kernel(x_ref, gamma_ref, beta_ref, o_ref, *, eps, n_rows):
    """Single-pass GRN when the whole (N, D) tensor fits in VMEM."""
    x = x_ref[...].astype(jnp.float32)                               # (N, D)
    gx = jnp.sqrt(jnp.sum(x * x, axis=1, keepdims=True))             # (N, 1)
    denom = jnp.sum(gx, axis=0, keepdims=True) * (1.0 / n_rows) + eps
    nx = gx * pl.reciprocal(denom, approx=False)                     # (N, 1)
    gamma = gamma_ref[...].astype(jnp.float32)                       # (1, D)
    beta = beta_ref[...].astype(jnp.float32)                         # (1, D)
    o_ref[...] = (gamma * (x * nx) + beta).astype(o_ref.dtype)


def _grn_reduce_kernel(x_ref, sum_ref, *, n_rows, tn, needs_mask):
    """Pass 1: accumulate sum over rows of ||x_row||_2 into a (1,1) output."""
    i = pl.program_id(0)

    @pl.when(i == 0)
    def _():
        sum_ref[...] = jnp.zeros_like(sum_ref)

    x = x_ref[...].astype(jnp.float32)                               # (tn, D)
    gx = jnp.sqrt(jnp.sum(x * x, axis=1, keepdims=True))             # (tn, 1)
    if needs_mask:
        # Only the last tile has padded rows; masking the (tn, 1) gx vector is
        # cheap and robust to whatever garbage the padded region reads as.
        row = i * tn + jax.lax.broadcasted_iota(jnp.int32, (tn, 1), 0)
        gx = jnp.where(row < n_rows, gx, 0.0)
    sum_ref[...] += jnp.sum(gx, axis=0, keepdims=True)               # (1, 1)


def _grn_apply_kernel(sum_ref, x_ref, gamma_ref, beta_ref, o_ref, *, eps, n_rows):
    """Pass 2: out = gamma * (x * Gx / (mean(Gx) + eps)) + beta, per row tile."""
    x = x_ref[...].astype(jnp.float32)                               # (tn, D)
    gx = jnp.sqrt(jnp.sum(x * x, axis=1, keepdims=True))             # (tn, 1)
    denom = sum_ref[...] * (1.0 / n_rows) + eps                      # (1, 1)
    nx = gx * pl.reciprocal(denom, approx=False)                     # (tn, 1)
    gamma = gamma_ref[...].astype(jnp.float32)                       # (1, D)
    beta = beta_ref[...].astype(jnp.float32)                         # (1, D)
    o_ref[...] = (gamma * (x * nx) + beta).astype(o_ref.dtype)


def _choose_tn(n, d, vmem_budget_bytes=_VMEM_LIMIT_BYTES):
    # Budget ~4 buffers of (tn, d) f32 (double-buffered input + output tiles),
    # plus headroom for gamma/beta and temporaries.
    per_row_bytes = 16 * d
    tn = min(1024, max(8, (vmem_budget_bytes // 2) // max(per_row_bytes, 1)))
    tn -= tn % 8
    tn = max(tn, 8)
    if n <= tn:
        return n  # single full-extent tile (allowed regardless of alignment)
    return tn


def grn(x, gamma, beta, eps=1e-6, tn=None):
    N, D = x.shape
    gamma = jnp.reshape(gamma, (1, D))
    beta = jnp.reshape(beta, (1, D))

    # Fast path: the whole tensor fits easily in VMEM -> one fused kernel,
    # x is read from HBM once instead of twice.
    x_bytes = N * D * jnp.dtype(x.dtype).itemsize
    if tn is None and x_bytes <= _FUSED_X_BYTES_MAX:
        return pl.pallas_call(
            functools.partial(_grn_fused_kernel, eps=eps, n_rows=N),
            out_shape=jax.ShapeDtypeStruct((N, D), x.dtype),
            grid_spec=pltpu.PrefetchScalarGridSpec(
                num_scalar_prefetch=0,
                grid=(1,),
                in_specs=[
                    pl.BlockSpec((N, D), lambda i: (0, 0)),
                    pl.BlockSpec((1, D), lambda i: (0, 0)),
                    pl.BlockSpec((1, D), lambda i: (0, 0)),
                ],
                out_specs=pl.BlockSpec((N, D), lambda i: (0, 0)),
            ),
            compiler_params=pltpu.CompilerParams(
                dimension_semantics=("arbitrary",),
                vmem_limit_bytes=_VMEM_LIMIT_BYTES,
            ),
        )(x, gamma, beta)

    if tn is None:
        tn = _choose_tn(N, D)
    if tn >= N:
        tn = N
    else:
        assert tn % 8 == 0, "row tile must be a multiple of 8 (sublane size)"
    n_tiles = pl.cdiv(N, tn)
    needs_mask = (N % tn) != 0

    # Pass 1: sum of per-row L2 norms (output block resident -> accumulator).
    gx_sum = pl.pallas_call(
        functools.partial(_grn_reduce_kernel, n_rows=N, tn=tn, needs_mask=needs_mask),
        out_shape=jax.ShapeDtypeStruct((1, 1), jnp.float32),
        grid_spec=pltpu.PrefetchScalarGridSpec(
            num_scalar_prefetch=0,
            grid=(n_tiles,),
            in_specs=[pl.BlockSpec((tn, D), lambda i: (i, 0))],
            out_specs=pl.BlockSpec((1, 1), lambda i: (0, 0)),
        ),
        compiler_params=pltpu.CompilerParams(
            dimension_semantics=("arbitrary",),
            vmem_limit_bytes=_VMEM_LIMIT_BYTES,
        ),
    )(x)

    # Pass 2: apply normalization; embarrassingly parallel over row tiles
    # (markable "parallel" -> shardable across both TensorCores on v7x).
    out = pl.pallas_call(
        functools.partial(_grn_apply_kernel, eps=eps, n_rows=N),
        out_shape=jax.ShapeDtypeStruct((N, D), x.dtype),
        grid_spec=pltpu.PrefetchScalarGridSpec(
            num_scalar_prefetch=0,
            grid=(n_tiles,),
            in_specs=[
                pl.BlockSpec((1, 1), lambda i: (0, 0)),   # Gx sum (resident)
                pl.BlockSpec((tn, D), lambda i: (i, 0)),  # x tile
                pl.BlockSpec((1, D), lambda i: (0, 0)),   # gamma (resident)
                pl.BlockSpec((1, D), lambda i: (0, 0)),   # beta (resident)
            ],
            out_specs=pl.BlockSpec((tn, D), lambda i: (i, 0)),
        ),
        compiler_params=pltpu.CompilerParams(
            dimension_semantics=("parallel",),
            vmem_limit_bytes=_VMEM_LIMIT_BYTES,
        ),
    )(gx_sum, x, gamma, beta)
    return out


def grn_ref(x, gamma, beta, eps=1e-6):
    gx = jnp.linalg.norm(x, ord=2, axis=1, keepdims=True)
    nx = gx / (jnp.mean(gx, axis=0, keepdims=True) + eps)
    return gamma * (x * nx) + beta


if __name__ == "__main__":
    key = jax.random.PRNGKey(0)

    # Case 1: small, lane-dense (D multiple of 128) -> fused single-pass path.
    # Deterministic parameter init matching nn.Parameter(torch.ones/zeros).
    N1, D1 = 20, 128
    x1 = jax.random.normal(key, (N1, D1), dtype=jnp.float32)
    gamma1 = jnp.ones((1, D1), dtype=jnp.float32)
    beta1 = jnp.zeros((1, D1), dtype=jnp.float32)
    out1 = grn(x1, gamma1, beta1)
    jax.block_until_ready(out1)
    ref1 = grn_ref(x1, gamma1, beta1)
    assert out1.shape == (N1, D1)
    assert jnp.allclose(out1, ref1, atol=1e-5, rtol=1e-5)

    # Case 2: forced two-pass multi-tile path with a partial last tile
    # (exercises the gx row mask in the reduction and cross-tile accumulation).
    N2, D2 = 52, 256
    k1, k2 = jax.random.split(key)
    x2 = jax.random.normal(k1, (N2, D2), dtype=jnp.float32)
    gamma2 = 0.5 + jax.random.uniform(k2, (1, D2), dtype=jnp.float32)
    beta2 = 0.1 * jnp.arange(D2, dtype=jnp.float32).reshape(1, D2)
    out2 = grn(x2, gamma2, beta2, tn=16)
    jax.block_until_ready(out2)
    ref2 = grn_ref(x2, gamma2, beta2)
    assert out2.shape == (N2, D2)
    assert jnp.allclose(out2, ref2, atol=1e-5, rtol=1e-5)

    # Case 3: larger input so the automatic two-pass path (tn=None) is used
    # with the auto-chosen tile and an exact (no-mask) row tiling.
    N3, D3 = 2048, 512
    k3, k4 = jax.random.split(k2)
    x3 = jax.random.normal(k3, (N3, D3), dtype=jnp.float32)
    gamma3 = 1.0 + 0.01 * jax.random.normal(k4, (1, D3), dtype=jnp.float32)
    beta3 = jnp.zeros((1, D3), dtype=jnp.float32)
    out3 = grn(x3, gamma3, beta3)
    jax.block_until_ready(out3)
    ref3 = grn_ref(x3, gamma3, beta3)
    assert out3.shape == (N3, D3)
    assert jnp.allclose(out3, ref3, atol=1e-4, rtol=1e-4)

    print("KERNEL_OK")
</pallas_src>

<mosaic_0001>
module attributes {stable_mosaic.version = 11 : i64} {
  func.func @_grn_fused_kernel(%arg0: i32, %arg1: memref<20x128xf32, #tpu.memory_space<vmem>>, %arg2: memref<1x128xf32, #tpu.memory_space<vmem>>, %arg3: memref<1x128xf32, #tpu.memory_space<vmem>>, %arg4: memref<20x128xf32, #tpu.memory_space<vmem>>) attributes {dimension_semantics = [#tpu.dimension_semantics<arbitrary>], iteration_bounds = array<i64: 1>, scalar_prefetch = 0 : i64, scratch_operands = 0 : i64, tpu.core_type = #tpu.core_type<tc>, window_params = [{pipeline_mode = #tpu.pipeline_mode<synchronous>, transform_indices = @transform_0, window_bounds = array<i64: 20, 128>}, {pipeline_mode = #tpu.pipeline_mode<synchronous>, transform_indices = @transform_1, window_bounds = array<i64: 1, 128>}, {pipeline_mode = #tpu.pipeline_mode<synchronous>, transform_indices = @transform_2, window_bounds = array<i64: 1, 128>}, {pipeline_mode = #tpu.pipeline_mode<synchronous>, transform_indices = @transform_3, window_bounds = array<i64: 20, 128>}]} {
    %c0 = arith.constant 0 : index
    %c0_0 = arith.constant 0 : index
    %0 = vector.load %arg1[%c0, %c0_0] : memref<20x128xf32, #tpu.memory_space<vmem>>, vector<20x128xf32>
    %1 = arith.mulf %0, %0 : vector<20x128xf32>
    %cst = arith.constant dense<0.000000e+00> : vector<20xf32>
    %2 = vector.multi_reduction <add>, %1, %cst [1] : vector<20x128xf32> to vector<20xf32>
    %3 = vector.shape_cast %2 : vector<20xf32> to vector<20x1xf32>
    %4 = math.sqrt %3 : vector<20x1xf32>
    %cst_1 = arith.constant dense<0.000000e+00> : vector<1xf32>
    %5 = vector.multi_reduction <add>, %4, %cst_1 [0] : vector<20x1xf32> to vector<1xf32>
    %6 = vector.shape_cast %5 : vector<1xf32> to vector<1x1xf32>
    %cst_2 = arith.constant 5.000000e-02 : f32
    %7 = vector.broadcast %cst_2 : f32 to vector<1x1xf32>
    %8 = arith.mulf %6, %7 : vector<1x1xf32>
    %cst_3 = arith.constant 9.99999997E-7 : f32
    %9 = vector.broadcast %cst_3 : f32 to vector<1x1xf32>
    %10 = arith.addf %8, %9 : vector<1x1xf32>
    %11 = tpu.reciprocal %10 : vector<1x1xf32> -> vector<1x1xf32>
    %12 = vector.broadcast %11 : vector<1x1xf32> to vector<20x1xf32>
    %13 = arith.mulf %4, %12 : vector<20x1xf32>
    %c0_4 = arith.constant 0 : index
    %c0_5 = arith.constant 0 : index
    %14 = vector.load %arg2[%c0_4, %c0_5] : memref<1x128xf32, #tpu.memory_space<vmem>>, vector<1x128xf32>
    %c0_6 = arith.constant 0 : index
    %c0_7 = arith.constant 0 : index
    %15 = vector.load %arg3[%c0_6, %c0_7] : memref<1x128xf32, #tpu.memory_space<vmem>>, vector<1x128xf32>
    %16 = vector.broadcast %13 : vector<20x1xf32> to vector<20x128xf32>
    %17 = arith.mulf %0, %16 : vector<20x128xf32>
    %18 = vector.broadcast %14 : vector<1x128xf32> to vector<20x128xf32>
    %19 = arith.mulf %18, %17 : vector<20x128xf32>
    %20 = vector.broadcast %15 : vector<1x128xf32> to vector<20x128xf32>
    %21 = arith.addf %19, %20 : vector<20x128xf32>
    %c0_8 = arith.constant 0 : index
    %c0_9 = arith.constant 0 : index
    %22 = vector.load %arg4[%c0_8, %c0_9] : memref<20x128xf32, #tpu.memory_space<vmem>>, vector<20x128xf32>
    tpu.vector_store %arg4[%c0_8, %c0_9], %21 {strides = array<i32>} : memref<20x128xf32, #tpu.memory_space<vmem>>, vector<20x128xf32>,
    return
  }
  func.func @transform_0(%arg0: i32) -> (i32, i32) {
    %c0_i32 = arith.constant 0 : i32
    %c0_i32_0 = arith.constant 0 : i32
    %c0_i32_1 = arith.constant 0 : i32
    return %c0_i32, %c0_i32_0 : i32, i32
  }
  func.func @transform_1(%arg0: i32) -> (i32, i32) {
    %c0_i32 = arith.constant 0 : i32
    %c0_i32_0 = arith.constant 0 : i32
    %c0_i32_1 = arith.constant 0 : i32
    return %c0_i32, %c0_i32_0 : i32, i32
  }
  func.func @transform_2(%arg0: i32) -> (i32, i32) {
    %c0_i32 = arith.constant 0 : i32
    %c0_i32_0 = arith.constant 0 : i32
    %c0_i32_1 = arith.constant 0 : i32
    return %c0_i32, %c0_i32_0 : i32, i32
  }
  func.func @transform_3(%arg0: i32) -> (i32, i32) {
    %c0_i32 = arith.constant 0 : i32
    %c0_i32_0 = arith.constant 0 : i32
    %c0_i32_1 = arith.constant 0 : i32
    return %c0_i32, %c0_i32_0 : i32, i32
  }
}

</mosaic_0001>

<llo_original>
// kernel: tpu_custom_call.1
$region0: #{tpu_custom_call.1}
  #allocation0 [shape = 'u32[]', space=smem, size = 0x4, offset = 0x4, fixed_abs, tag = 'smem constant byte address 0x4 - core index']
  #allocation1 [shape = 'u32[72,128]{1,0:T(1,128)}', space=vmem, size = 0x9000, scoped, tag = 'internal scratch']
  %s0 = inlined_call_operand.hbm [shape: f32[20,128], index: 0, kind: input, shape index: {}]
  %s1 = inlined_call_operand.hbm [shape: f32[1,128], index: 1, kind: input, shape index: {}]
  %s2 = inlined_call_operand.vmem [shape: f32[1,128], index: 2, kind: input, shape index: {}]
  %s3 = inlined_call_operand.hbm [shape: f32[20,128], index: 3, kind: output, shape index: {}]
  %s4 = sld [smem:[#allocation0]]
  $region30: #{tpu_custom_call.1} parent=0
    _
  %s6 = ssub.s32 1, %s4
  %s7 = scalar_select 0, %s6, %s4
  $region1: #{tpu_custom_call.1} parent=0
    #allocation2 [shape = 'u8[12288]{0}', space=vmem, size = 0x3000, scoped, tag = 'input window, operand 0, single buffered']
    #allocation3 [shape = 's32[1]{0}', space=sflag, size = 0x4, scoped, tag = 'scoped memory for tpu_custom_call.1']
    #allocation4 [shape = 's32[1]{0}', space=sflag, size = 0x4, scoped, tag = 'scoped memory for tpu_custom_call.1']
    #allocation5 [shape = 'u8[512]{0}', space=vmem, size = 0x400, scoped, tag = 'input window, operand 1, single buffered']
    #allocation6 [shape = 's32[1]{0}', space=sflag, size = 0x4, scoped, tag = 'scoped memory for tpu_custom_call.1']
    #allocation7 [shape = 'u8[12288]{0}', space=vmem, size = 0x3000, scoped, tag = 'output window, operand 0, single buffered']
    %8 = vsyncpa [#allocation3], 0
    %9 = vsyncpa [#allocation6], 0
    %10 = vsyncpa [#allocation4], 0
    // Predicated region
    $region2: #{tpu_custom_call.1} parent=1 // pred_check
      _
    $region3: #{tpu_custom_call.1} parent=1 // pred_check_branch
      %12 = sbr.rel (0) target = $region5
    $region4: #{tpu_custom_call.1} parent=1 // pred_region
      %14 = vsyncadd [#allocation3], 0
      %s15 = sshll.u32 %s0, 4
      %s16 = int_to_ptr.hbm [resolvable:$true] %s15
      %s17 = sshll.u32 [#allocation2], 4
      %s18 = int_to_ptr.vmem [resolvable:$true] %s17
      %23 = dma.hbm_to_vmem [thread:$0]  %s16, 384, %s18, [#allocation3], 128, 128, 8
    $region5: #{tpu_custom_call.1} parent=1 // pred_fallthru
      _
    // Predicated region
    $region6: #{tpu_custom_call.1} parent=1 // pred_check
      _
    $region7: #{tpu_custom_call.1} parent=1 // pred_check_branch
      %25 = sbr.rel (0) target = $region9
    $region8: #{tpu_custom_call.1} parent=1 // pred_region
      %27 = vsyncadd [#allocation6], 0
      %s29 = sshll.u32 %s1, 4
      %s30 = int_to_ptr.hbm [resolvable:$true] %s29
      %s31 = sshll.u32 [#allocation5], 4
      %s32 = int_to_ptr.vmem [resolvable:$true] %s31
      %34 = dma.hbm_to_vmem [thread:$0]  %s30, 16, %s32, [#allocation6]
    $region9: #{tpu_custom_call.1} parent=1 // pred_fallthru
      _
    // Predicated region
    $region10: #{tpu_custom_call.1} parent=1 // pred_check
      _
    $region11: #{tpu_custom_call.1} parent=1 // pred_check_branch
      %36 = sbr.rel (0) target = $region13
    $region12: #{tpu_custom_call.1} parent=1 // pred_region
      _
    $region13: #{tpu_custom_call.1} parent=1 // pred_fallthru
      _
    // Predicated region
    $region14: #{tpu_custom_call.1} parent=1 // pred_check
      _
    $region15: #{tpu_custom_call.1} parent=1 // pred_check_branch
      %38 = sbr.rel (0) target = $region17
    $region16: #{tpu_custom_call.1} parent=1 // pred_region
      %40 = dma.done [#allocation3], 384
    $region17: #{tpu_custom_call.1} parent=1 // pred_fallthru
      _
    // Predicated region
    $region18: #{tpu_custom_call.1} parent=1 // pred_check
      _
    $region19: #{tpu_custom_call.1} parent=1 // pred_check_branch
      %42 = sbr.rel (0) target = $region21
    $region20: #{tpu_custom_call.1} parent=1 // pred_region
      %44 = dma.done [#allocation6], 16
    $region21: #{tpu_custom_call.1} parent=1 // pred_fallthru
      _
    %v45 = vld [vmem:[#allocation2] sm:$0xff]
    %v46 = vld [vmem:[#allocation2 + $0x8] sm:$0xff]
    %v47 = vld [vmem:[#allocation2 + $0x10] sm:$0xf]
    %v48 = vmul.f32 %v45, %v45
    %v49 = vmul.f32 %v46, %v46
    %v50 = vmul.f32 %v47, %v47
    %51 = vadd.xlane.f32.xlu0 %v48
    %v52 = vpop.xlane.xlu0 %51
    %53 = vadd.xlane.f32.xlu0 %v49
    %v54 = vpop.xlane.xlu0 %53
    %vm55 = vcmask 1043456
    %v56 = vsel %vm55, %v50, 0.0
    %57 = vadd.xlane.f32.xlu0 %v56
    %v58 = vpop.xlane.xlu0 %57
    %v59 = vrsqrt.pop %v52
    %v60 = vmul.f32 %v59, %v52
    %v61 = vmul.f32 %v60, %v59
    %v62 = vmul.f32 0.5, %v61
    %v63 = vsub.f32 1.5, %v62
    %v64 = vmul.f32 %v59, %v63
    %v65 = vmul.f32 %v52, %v64
    %vm66 = vcmp.eq.f32.partialorder %v52, inf
    %v67 = vsel %vm66, %v52, %v65
    %vm68 = vcmp.eq.f32.partialorder %v52, 0.0
    %v69 = vand.u32 %v52, 2147483648
    %v70 = vsel %vm68, %v69, %v67
    %v71 = vrsqrt.pop %v54
    %v72 = vmul.f32 %v71, %v54
    %v73 = vmul.f32 %v72, %v71
    %v74 = vmul.f32 0.5, %v73
    %v75 = vsub.f32 1.5, %v74
    %v76 = vmul.f32 %v71, %v75
    %v77 = vmul.f32 %v54, %v76
    %vm78 = vcmp.eq.f32.partialorder %v54, inf
    %v79 = vsel %vm78, %v54, %v77
    %vm80 = vcmp.eq.f32.partialorder %v54, 0.0
    %v81 = vand.u32 %v54, 2147483648
    %v82 = vsel %vm80, %v81, %v79
    %v83 = vrsqrt.pop %v58
    %v84 = vmul.f32 %v83, %v58
    %v85 = vmul.f32 %v84, %v83
    %v86 = vmul.f32 0.5, %v85
    %v87 = vsub.f32 1.5, %v86
    %v88 = vmul.f32 %v83, %v87
    %v89 = vmul.f32 %v58, %v88
    %vm90 = vcmp.eq.f32.partialorder %v58, inf
    %v91 = vsel %vm90, %v58, %v89
    %vm92 = vcmp.eq.f32.partialorder %v58, 0.0
    %v93 = vand.u32 %v58, 2147483648
    %v94 = vsel %vm92, %v93, %v91
    %v95 = vadd.f32 %v70, %v82
    %v96 = vsel %vm55, %v94, 0.0
    %v97 = vadd.f32 %v95, %v96
    %v98 = vrot.slane %v97, 4
    %v99 = vadd.f32 %v97, %v98
    %v100 = vrot.slane %v99, 2
    %v101 = vadd.f32 %v99, %v100
    %v102 = vrot.slane %v101, 1
    %v103 = vadd.f32 %v101, %v102
    %v104 = vmul.f32 %v103, 0.05
    %v105 = vadd.f32 %v104, 1e-06
    %v106 = vrcp.pop %v105
    %v107 = vmul.f32 %v105, %v106
    %v108 = vsub.f32 1.0, %v107
    %v109 = vmul.f32 %v106, %v108
    %v110 = vadd.f32 %v106, %v109
    %vm111 = vweird.f32 %v105
    %vm112 = vweird.f32 %v106
    %vm113 = vmor %vm111, %vm112
    %v114 = vsel %vm113, %v106, %v110
    %v115 = vand.u32 2147483647, %v105
    %vm116 = vcmp.eq.f32.partialorder %v115, 8.507059e+37
    %v117 = vand.u32 %v105, 2147483648
    %v118 = vor.u32 1.1754944e-38, %v117
    %v119 = vsel %vm116, %v118, %v114
    %v120 = vmul.f32 %v70, %v119
    %v121 = vmul.f32 %v82, %v119
    %v122 = vmul.f32 %v94, %v119
    %v123 = vld [vmem:[#allocation5] sm:$0x1]
    %v124 = vld [vmem:[%s2] sm:$0x1]
    %v125 = vmul.f32 %v45, %v120
    %v126 = vmul.f32 %v46, %v121
    %v127 = vmul.f32 %v47, %v122
    %v129 = vperm.slane %v123, 0
    %v131 = vmul.f32 %v129, %v125
    %v132 = vmul.f32 %v129, %v126
    %v133 = vmul.f32 %v129, %v127
    %v135 = vperm.slane %v124, 0
    %v137 = vadd.f32 %v131, %v135
    %v138 = vadd.f32 %v132, %v135
    %v139 = vadd.f32 %v133, %v135
    %140 = vst [vmem:[#allocation7] sm:$0xff] %v137
    %141 = vst [vmem:[#allocation7 + $0x8] sm:$0xff] %v138
    %142 = vst [vmem:[#allocation7 + $0x10] sm:$0xf] %v139
    // Predicated region
    $region22: #{tpu_custom_call.1} parent=1 // pred_check
      _
    $region23: #{tpu_custom_call.1} parent=1 // pred_check_branch
      %144 = sbr.rel (0) target = $region25
    $region24: #{tpu_custom_call.1} parent=1 // pred_region
      %146 = vsyncadd [#allocation4], 0
      %s147 = sshll.u32 [#allocation7], 4
      %s148 = int_to_ptr.vmem [resolvable:$true] %s147
      %s149 = sshll.u32 %s3, 4
      %s150 = int_to_ptr.hbm [resolvable:$true] %s149
      %155 = dma.vmem_to_hbm [thread:$0]  %s148, 384, %s150, [#allocation4], 128, 128, 8
    $region25: #{tpu_custom_call.1} parent=1 // pred_fallthru
      _
    // Predicated region
    $region26: #{tpu_custom_call.1} parent=1 // pred_check
      _
    $region27: #{tpu_custom_call.1} parent=1 // pred_check_branch
      %157 = sbr.rel (0) target = $region29
    $region28: #{tpu_custom_call.1} parent=1 // pred_region
      %159 = dma.done [#allocation4], 384
    $region29: #{tpu_custom_call.1} parent=1 // pred_fallthru
      _
    %160 = vsyncpa [#allocation3], 1
    %161 = vsyncpa [#allocation6], 1
    %162 = vsyncpa [#allocation4], 1

</llo_original>
